<compile_context>
chip_gen: v7x
topology: tpu7x:2x2x1
jax: 0.10.0
libtpu: 0.0.40
codegen_flags: <defaults>
</compile_context>

<pallas_src>
import functools

import jax
import jax.numpy as jnp
import numpy as np
from jax.experimental import pallas as pl
from jax.experimental.pallas import tpu as pltpu


# ----------------------------------------------------------------------------
# Kernel
# ----------------------------------------------------------------------------
def _dwconv3x3_kernel(tapw_ref, x_ref, o_ref, xp_ref, *, W, pad):
    """Shared-weight 3x3 conv (stride 1, zero pad 1) on a tile of flattened planes.

    tapw_ref : VMEM (10, H*W) f32 -- rows 0..8: per-tap weights with the columns
               that would wrap around a row edge already zeroed; row 9: bias.
    x_ref    : VMEM (TN, H*W)  input planes (any float dtype).
    o_ref    : VMEM (TN, H*W)  output planes (same dtype as input).
    xp_ref   : VMEM (TN, pad + H*W + W + 1) f32 scratch: the planes with a zero
               halo of W+1 lanes on each side of the interior, which starts at
               lane `pad` (a multiple of 128 -> lane-aligned copy).
    """
    TN, HW = x_ref.shape
    halo = W + 1

    # Build the zero-haloed planes in VMEM (no HBM padding pass).
    xp_ref[:, pad - halo:pad] = jnp.zeros((TN, halo), jnp.float32)
    xp_ref[:, pad + HW:pad + HW + halo] = jnp.zeros((TN, halo), jnp.float32)
    xp_ref[:, pad:pad + HW] = x_ref[...].astype(jnp.float32)

    # Bias folded into the accumulator init (broadcast over the TN planes).
    acc = jnp.broadcast_to(tapw_ref[9:10, :], (TN, HW))

    # 9 taps: lane-offset slice of the haloed scratch x pre-masked weight row.
    # Vertical out-of-range taps land in the zero halo; horizontal wrap-around
    # columns are zeroed inside tapw, so no per-element masking is needed.
    k = 0
    for oy in (-1, 0, 1):
        for ox in (-1, 0, 1):
            start = pad + oy * W + ox
            acc = acc + xp_ref[:, start:start + HW] * tapw_ref[k:k + 1, :]
            k += 1

    o_ref[...] = acc.astype(o_ref.dtype)


# ----------------------------------------------------------------------------
# Tile sizing
# ----------------------------------------------------------------------------
def _pick_block_n(N, HW, in_itemsize, out_itemsize, scratch_w):
    """Largest plane tile that (a) fits a ~16 MiB VMEM working-set budget,
    (b) keeps >= 2 grid steps when there is enough work (v7x: 2 TensorCores),
    (c) satisfies the sublane rule (multiple of 8, or equal to the full dim)."""
    per_plane = (2 * HW * in_itemsize      # double-buffered input block
                 + 2 * HW * out_itemsize   # double-buffered output block
                 + scratch_w * 4           # f32 halo scratch
                 + 2 * HW * 4)             # accumulator + one live temporary
    budget = 16 * 1024 * 1024
    tn = max(8, min(budget // per_plane, 1024))
    tn = (tn // 8) * 8
    if N >= 16:                            # keep the grid splittable across 2 TCs
        tn = min(tn, ((-(-N // 2) + 7) // 8) * 8)
    tn = min(tn, ((N + 7) // 8) * 8)
    if tn > N:                             # small N: full dim is always allowed
        tn = N
    return int(tn)


# ----------------------------------------------------------------------------
# Wrapper
# ----------------------------------------------------------------------------
def depthwise_conv_forward(x, weight, bias):
    """Pallas TPU implementation of depthwise_conv.forward.

    x      : (B, C, H, W)
    weight : (1, 1, 3, 3)   Conv2d(1, 1, 3) weight, shared across all planes
    bias   : (1,)           Conv2d bias
    returns: (B, C, H, W), same dtype as x
    """
    B, C, H, W = x.shape
    N = B * C
    HW = H * W

    # Flattened-plane view: contiguous reshape -> no HBM copy.
    x2d = x.reshape(N, HW)

    # Per-tap weight rows with horizontal wrap-around columns pre-zeroed, plus
    # the bias as row 9.  Tiny (10, H*W) tensor computed once outside the grid.
    col = np.arange(HW) % W
    tap_mask = np.ones((9, HW), np.float32)
    tap_mask[0::3, :] *= (col != 0).astype(np.float32)       # ox = -1 taps
    tap_mask[2::3, :] *= (col != W - 1).astype(np.float32)   # ox = +1 taps
    tapw = jnp.concatenate(
        [weight.reshape(9, 1).astype(jnp.float32) * jnp.asarray(tap_mask),
         jnp.broadcast_to(bias.reshape(1, 1).astype(jnp.float32), (1, HW))],
        axis=0)                                              # (10, H*W) f32

    # Scratch geometry: interior starts at a lane offset that is a multiple of
    # 128 (aligned copy), flanked by W+1 halo lanes on each side.
    halo = W + 1
    pad = ((halo + 127) // 128) * 128
    scratch_w = pad + HW + halo

    # TODO(synk): very large planes (H*W*4 approaching VMEM) would also need
    # spatial tiling of the conv; plane tiling alone covers this module's maps.
    itemsize = x.dtype.itemsize
    tn = _pick_block_n(N, HW, itemsize, itemsize, scratch_w)
    grid_n = pl.cdiv(N, tn)   # partial last block is fine: extra planes dropped

    out2d = pl.pallas_call(
        functools.partial(_dwconv3x3_kernel, W=W, pad=pad),
        out_shape=jax.ShapeDtypeStruct((N, HW), x.dtype),
        grid_spec=pltpu.PrefetchScalarGridSpec(
            num_scalar_prefetch=0,
            grid=(grid_n,),
            in_specs=[
                pl.BlockSpec((10, HW), lambda n: (0, 0)),    # resident tap table
                pl.BlockSpec((tn, HW), lambda n: (n, 0)),    # input planes
            ],
            out_specs=pl.BlockSpec((tn, HW), lambda n: (n, 0)),
            scratch_shapes=[pltpu.VMEM((tn, scratch_w), jnp.float32)],
        ),
        compiler_params=pltpu.CompilerParams(
            dimension_semantics=("parallel",),
            vmem_limit_bytes=32 * 1024 * 1024,
        ),
    )(tapw, x2d)

    return out2d.reshape(B, C, H, W)


# ----------------------------------------------------------------------------
# Driver
# ----------------------------------------------------------------------------
if __name__ == "__main__":
    B, C, H, W = 2, 4, 16, 16

    key = jax.random.PRNGKey(0)
    kx, kw, kb = jax.random.split(key, 3)

    x = jax.random.normal(kx, (B, C, H, W), jnp.float32)
    weight = jax.random.normal(kw, (1, 1, 3, 3), jnp.float32) * 0.1
    bias = jax.random.normal(kb, (1,), jnp.float32) * 0.1

    out = depthwise_conv_forward(x, weight, bias)
    out = jax.block_until_ready(out)

    # Reference: same math via XLA's conv (independent code path).
    ref = jax.lax.conv_general_dilated(
        x.reshape(B * C, 1, H, W), weight,
        window_strides=(1, 1), padding=((1, 1), (1, 1)),
        dimension_numbers=("NCHW", "OIHW", "NCHW"))
    ref = (ref + bias.reshape(1, 1, 1, 1)).reshape(B, C, H, W)

    assert out.shape == (B, C, H, W)
    assert out.dtype == x.dtype
    np.testing.assert_allclose(np.asarray(out), np.asarray(ref),
                               rtol=1e-5, atol=1e-5)
    print("KERNEL_OK")
</pallas_src>

<mosaic_0001>
module attributes {stable_mosaic.version = 11 : i64} {
  func.func @_dwconv3x3_kernel(%arg0: i32, %arg1: memref<10x256xf32, #tpu.memory_space<vmem>>, %arg2: memref<8x256xf32, #tpu.memory_space<vmem>>, %arg3: memref<8x256xf32, #tpu.memory_space<vmem>>, %arg4: memref<8x401xf32, #tpu.memory_space<vmem>>) attributes {dimension_semantics = [#tpu.dimension_semantics<parallel>], iteration_bounds = array<i64: 1>, scalar_prefetch = 0 : i64, scratch_operands = 1 : i64, tpu.core_type = #tpu.core_type<tc>, window_params = [{pipeline_mode = #tpu.pipeline_mode<synchronous>, transform_indices = @transform_0, window_bounds = array<i64: 10, 256>}, {transform_indices = @transform_1, window_bounds = array<i64: 8, 256>}, {transform_indices = @transform_2, window_bounds = array<i64: 8, 256>}]} {
    %cst = arith.constant 0.000000e+00 : f32
    %0 = vector.broadcast %cst : f32 to vector<8x17xf32>
    %c0 = arith.constant 0 : index
    %c111 = arith.constant 111 : index
    %1 = vector.load %arg4[%c0, %c111] : memref<8x401xf32, #tpu.memory_space<vmem>>, vector<8x17xf32>
    tpu.vector_store %arg4[%c0, %c111], %0 {strides = array<i32>} : memref<8x401xf32, #tpu.memory_space<vmem>>, vector<8x17xf32>,
    %cst_0 = arith.constant 0.000000e+00 : f32
    %2 = vector.broadcast %cst_0 : f32 to vector<8x17xf32>
    %c0_1 = arith.constant 0 : index
    %c384 = arith.constant 384 : index
    %3 = vector.load %arg4[%c0_1, %c384] : memref<8x401xf32, #tpu.memory_space<vmem>>, vector<8x17xf32>
    tpu.vector_store %arg4[%c0_1, %c384], %2 {strides = array<i32>} : memref<8x401xf32, #tpu.memory_space<vmem>>, vector<8x17xf32>,
    %c0_2 = arith.constant 0 : index
    %c0_3 = arith.constant 0 : index
    %4 = vector.load %arg2[%c0_2, %c0_3] : memref<8x256xf32, #tpu.memory_space<vmem>>, vector<8x256xf32>
    %c0_4 = arith.constant 0 : index
    %c128 = arith.constant 128 : index
    %5 = vector.load %arg4[%c0_4, %c128] : memref<8x401xf32, #tpu.memory_space<vmem>>, vector<8x256xf32>
    tpu.vector_store %arg4[%c0_4, %c128], %4 {strides = array<i32>} : memref<8x401xf32, #tpu.memory_space<vmem>>, vector<8x256xf32>,
    %c9 = arith.constant 9 : index
    %c0_5 = arith.constant 0 : index
    %6 = vector.load %arg1[%c9, %c0_5] : memref<10x256xf32, #tpu.memory_space<vmem>>, vector<1x256xf32>
    %7 = vector.shape_cast %6 : vector<1x256xf32> to vector<1x256xf32>
    %8 = vector.broadcast %7 : vector<1x256xf32> to vector<8x256xf32>
    %c0_6 = arith.constant 0 : index
    %c111_7 = arith.constant 111 : index
    %9 = vector.load %arg4[%c0_6, %c111_7] : memref<8x401xf32, #tpu.memory_space<vmem>>, vector<8x256xf32>
    %c0_8 = arith.constant 0 : index
    %c0_9 = arith.constant 0 : index
    %10 = vector.load %arg1[%c0_8, %c0_9] : memref<10x256xf32, #tpu.memory_space<vmem>>, vector<1x256xf32>
    %11 = vector.broadcast %10 : vector<1x256xf32> to vector<8x256xf32>
    %12 = arith.mulf %9, %11 : vector<8x256xf32>
    %13 = arith.addf %8, %12 : vector<8x256xf32>
    %c0_10 = arith.constant 0 : index
    %c112 = arith.constant 112 : index
    %14 = vector.load %arg4[%c0_10, %c112] : memref<8x401xf32, #tpu.memory_space<vmem>>, vector<8x256xf32>
    %c1 = arith.constant 1 : index
    %c0_11 = arith.constant 0 : index
    %15 = vector.load %arg1[%c1, %c0_11] : memref<10x256xf32, #tpu.memory_space<vmem>>, vector<1x256xf32>
    %16 = vector.broadcast %15 : vector<1x256xf32> to vector<8x256xf32>
    %17 = arith.mulf %14, %16 : vector<8x256xf32>
    %18 = arith.addf %13, %17 : vector<8x256xf32>
    %c0_12 = arith.constant 0 : index
    %c113 = arith.constant 113 : index
    %19 = vector.load %arg4[%c0_12, %c113] : memref<8x401xf32, #tpu.memory_space<vmem>>, vector<8x256xf32>
    %c2 = arith.constant 2 : index
    %c0_13 = arith.constant 0 : index
    %20 = vector.load %arg1[%c2, %c0_13] : memref<10x256xf32, #tpu.memory_space<vmem>>, vector<1x256xf32>
    %21 = vector.broadcast %20 : vector<1x256xf32> to vector<8x256xf32>
    %22 = arith.mulf %19, %21 : vector<8x256xf32>
    %23 = arith.addf %18, %22 : vector<8x256xf32>
    %c0_14 = arith.constant 0 : index
    %c127 = arith.constant 127 : index
    %24 = vector.load %arg4[%c0_14, %c127] : memref<8x401xf32, #tpu.memory_space<vmem>>, vector<8x256xf32>
    %c3 = arith.constant 3 : index
    %c0_15 = arith.constant 0 : index
    %25 = vector.load %arg1[%c3, %c0_15] : memref<10x256xf32, #tpu.memory_space<vmem>>, vector<1x256xf32>
    %26 = vector.broadcast %25 : vector<1x256xf32> to vector<8x256xf32>
    %27 = arith.mulf %24, %26 : vector<8x256xf32>
    %28 = arith.addf %23, %27 : vector<8x256xf32>
    %c0_16 = arith.constant 0 : index
    %c128_17 = arith.constant 128 : index
    %29 = vector.load %arg4[%c0_16, %c128_17] : memref<8x401xf32, #tpu.memory_space<vmem>>, vector<8x256xf32>
    %c4 = arith.constant 4 : index
    %c0_18 = arith.constant 0 : index
    %30 = vector.load %arg1[%c4, %c0_18] : memref<10x256xf32, #tpu.memory_space<vmem>>, vector<1x256xf32>
    %31 = vector.broadcast %30 : vector<1x256xf32> to vector<8x256xf32>
    %32 = arith.mulf %29, %31 : vector<8x256xf32>
    %33 = arith.addf %28, %32 : vector<8x256xf32>
    %c0_19 = arith.constant 0 : index
    %c129 = arith.constant 129 : index
    %34 = vector.load %arg4[%c0_19, %c129] : memref<8x401xf32, #tpu.memory_space<vmem>>, vector<8x256xf32>
    %c5 = arith.constant 5 : index
    %c0_20 = arith.constant 0 : index
    %35 = vector.load %arg1[%c5, %c0_20] : memref<10x256xf32, #tpu.memory_space<vmem>>, vector<1x256xf32>
    %36 = vector.broadcast %35 : vector<1x256xf32> to vector<8x256xf32>
    %37 = arith.mulf %34, %36 : vector<8x256xf32>
    %38 = arith.addf %33, %37 : vector<8x256xf32>
    %c0_21 = arith.constant 0 : index
    %c143 = arith.constant 143 : index
    %39 = vector.load %arg4[%c0_21, %c143] : memref<8x401xf32, #tpu.memory_space<vmem>>, vector<8x256xf32>
    %c6 = arith.constant 6 : index
    %c0_22 = arith.constant 0 : index
    %40 = vector.load %arg1[%c6, %c0_22] : memref<10x256xf32, #tpu.memory_space<vmem>>, vector<1x256xf32>
    %41 = vector.broadcast %40 : vector<1x256xf32> to vector<8x256xf32>
    %42 = arith.mulf %39, %41 : vector<8x256xf32>
    %43 = arith.addf %38, %42 : vector<8x256xf32>
    %c0_23 = arith.constant 0 : index
    %c144 = arith.constant 144 : index
    %44 = vector.load %arg4[%c0_23, %c144] : memref<8x401xf32, #tpu.memory_space<vmem>>, vector<8x256xf32>
    %c7 = arith.constant 7 : index
    %c0_24 = arith.constant 0 : index
    %45 = vector.load %arg1[%c7, %c0_24] : memref<10x256xf32, #tpu.memory_space<vmem>>, vector<1x256xf32>
    %46 = vector.broadcast %45 : vector<1x256xf32> to vector<8x256xf32>
    %47 = arith.mulf %44, %46 : vector<8x256xf32>
    %48 = arith.addf %43, %47 : vector<8x256xf32>
    %c0_25 = arith.constant 0 : index
    %c145 = arith.constant 145 : index
    %49 = vector.load %arg4[%c0_25, %c145] : memref<8x401xf32, #tpu.memory_space<vmem>>, vector<8x256xf32>
    %c8 = arith.constant 8 : index
    %c0_26 = arith.constant 0 : index
    %50 = vector.load %arg1[%c8, %c0_26] : memref<10x256xf32, #tpu.memory_space<vmem>>, vector<1x256xf32>
    %51 = vector.broadcast %50 : vector<1x256xf32> to vector<8x256xf32>
    %52 = arith.mulf %49, %51 : vector<8x256xf32>
    %53 = arith.addf %48, %52 : vector<8x256xf32>
    %c0_27 = arith.constant 0 : index
    %c0_28 = arith.constant 0 : index
    %54 = vector.load %arg3[%c0_27, %c0_28] : memref<8x256xf32, #tpu.memory_space<vmem>>, vector<8x256xf32>
    tpu.vector_store %arg3[%c0_27, %c0_28], %53 {strides = array<i32>} : memref<8x256xf32, #tpu.memory_space<vmem>>, vector<8x256xf32>,
    return
  }
  func.func @transform_0(%arg0: i32) -> (i32, i32) {
    %c0_i32 = arith.constant 0 : i32
    %c0_i32_0 = arith.constant 0 : i32
    %c0_i32_1 = arith.constant 0 : i32
    return %c0_i32, %c0_i32_0 : i32, i32
  }
  func.func @transform_1(%arg0: i32) -> (i32, i32) {
    %c0_i32 = arith.constant 0 : i32
    %c0_i32_0 = arith.constant 0 : i32
    return %arg0, %c0_i32 : i32, i32
  }
  func.func @transform_2(%arg0: i32) -> (i32, i32) {
    %c0_i32 = arith.constant 0 : i32
    %c0_i32_0 = arith.constant 0 : i32
    return %arg0, %c0_i32 : i32, i32
  }
}

</mosaic_0001>

<llo_original>
// kernel: tpu_custom_call.1
$region0: #{tpu_custom_call.1}
  #allocation0 [shape = 'u32[]', space=smem, size = 0x4, offset = 0x4, fixed_abs, tag = 'smem constant byte address 0x4 - core index']
  #allocation1 [shape = 'u32[144,128]{1,0:T(1,128)}', space=vmem, size = 0x12000, scoped, tag = 'internal scratch']
  #allocation2 [shape = 'f32[8,401]{1,0:T(8,128)}', space=vmem, size = 0x4000, scoped, tag = 'scratch operand']
  %s0 = inlined_call_operand.hbm [shape: f32[10,256], index: 0, kind: input, shape index: {}]
  %s1 = inlined_call_operand.hbm [shape: f32[8,256], index: 1, kind: input, shape index: {}]
  %s2 = inlined_call_operand.hbm [shape: f32[8,256], index: 2, kind: output, shape index: {}]
  %s3 = sld [smem:[#allocation0]]
  $region26: #{tpu_custom_call.1} parent=0
    _
  %s5 = ssub.s32 1, %s3
  %s6 = scalar_select 0, %s5, %s3
  $region1: #{tpu_custom_call.1} parent=0
    #allocation3 [shape = 'u8[16384]{0}', space=vmem, size = 0x4000, scoped, tag = 'input window, operand 0, single buffered']
    #allocation4 [shape = 's32[1]{0}', space=sflag, size = 0x4, scoped, tag = 'scoped memory for tpu_custom_call.1']
    #allocation5 [shape = 's32[1]{0}', space=sflag, size = 0x4, scoped, tag = 'scoped memory for tpu_custom_call.1']
    #allocation6 [shape = 'u8[8192]{0}', space=vmem, size = 0x2000, scoped, tag = 'input window, operand 1, single buffered']
    #allocation7 [shape = 's32[1]{0}', space=sflag, size = 0x4, scoped, tag = 'scoped memory for tpu_custom_call.1']
    #allocation8 [shape = 'u8[8192]{0}', space=vmem, size = 0x2000, scoped, tag = 'output window, operand 0, single buffered']
    %7 = vsyncpa [#allocation4], 0
    %8 = vsyncpa [#allocation7], 0
    %9 = vsyncpa [#allocation5], 0
    // Predicated region
    $region2: #{tpu_custom_call.1} parent=1 // pred_check
      _
    $region3: #{tpu_custom_call.1} parent=1 // pred_check_branch
      %11 = sbr.rel (0) target = $region5
    $region4: #{tpu_custom_call.1} parent=1 // pred_region
      %s13 = ssub.s32 512, 512
      %14 = vsyncadd [#allocation4], %s13
      %s15 = sshll.u32 [#allocation3], 4
      %s16 = int_to_ptr.vmem [resolvable:$true] %s15
      %21 = dma.hbm_to_vmem [thread:$0]  %s0, 512, %s16, [#allocation4], 256, 256, 16
    $region5: #{tpu_custom_call.1} parent=1 // pred_fallthru
      _
    // Predicated region
    $region6: #{tpu_custom_call.1} parent=1 // pred_check
      _
    $region7: #{tpu_custom_call.1} parent=1 // pred_check_branch
      %23 = sbr.rel (0) target = $region9
    $region8: #{tpu_custom_call.1} parent=1 // pred_region
      %s25 = ssub.s32 256, 256
      %26 = vsyncadd [#allocation7], %s25
      %s28 = sshll.u32 [#allocation6], 4
      %s29 = int_to_ptr.vmem [resolvable:$true] %s28
      %31 = dma.hbm_to_vmem [thread:$0]  %s1, 256, %s29, [#allocation7]
    $region9: #{tpu_custom_call.1} parent=1 // pred_fallthru
      _
    // Predicated region
    $region10: #{tpu_custom_call.1} parent=1 // pred_check
      _
    $region11: #{tpu_custom_call.1} parent=1 // pred_check_branch
      %33 = sbr.rel (0) target = $region13
    $region12: #{tpu_custom_call.1} parent=1 // pred_region
      %34 = dma.done [#allocation4], 512
    $region13: #{tpu_custom_call.1} parent=1 // pred_fallthru
      _
    // Predicated region
    $region14: #{tpu_custom_call.1} parent=1 // pred_check
      _
    $region15: #{tpu_custom_call.1} parent=1 // pred_check_branch
      %36 = sbr.rel (0) target = $region17
    $region16: #{tpu_custom_call.1} parent=1 // pred_region
      %37 = dma.done [#allocation7], 256
    $region17: #{tpu_custom_call.1} parent=1 // pred_fallthru
      _
    %vm38 = vcmask 1048440
    %39 = vst.msk [vmem:[#allocation2] sm:$0xff] %vm38, 0.0
    %vm40 = vcmask 138240
    %41 = vst.msk [vmem:[#allocation2 + $0x18] sm:$0xff] %vm40, 0.0
    %v42 = vld [vmem:[#allocation6] sm:$0xff]
    %v43 = vld [vmem:[#allocation6 + $0x8] sm:$0xff]
    %44 = vst [vmem:[#allocation2 + $0x8] sm:$0xff] %v42
    %45 = vst [vmem:[#allocation2 + $0x10] sm:$0xff] %v43
    %s46 = scalar_lea.vmem [#allocation3], 17
    %v47 = vld [vmem:[%s46] ss:$8 sm:$0x3]
    %v49 = vlaneseq
    %v50 = vshrl.u32 %v49, 7
    %v51 = vsub.s32 0, %v50
    %v52 = vrot.slane %v47, %v51
    %v53 = vlaneseq
    %v54 = vshrl.u32 %v53, 7
    %v55 = vsub.s32 1, %v54
    %v56 = vrot.slane %v47, %v55
    %v59 = vld [vmem:[#allocation2] sm:$0xff]
    %v60 = vld [vmem:[#allocation2 + $0x8] sm:$0xff]
    %v61 = vld [vmem:[#allocation2 + $0x10] sm:$0xff]
    %v62 = vld [vmem:[#allocation3] ss:$8 sm:$0x3]
    %v64 = vlaneseq
    %v65 = vshrl.u32 %v64, 7
    %v66 = vsub.s32 0, %v65
    %v67 = vrot.slane %v62, %v66
    %v68 = vlaneseq
    %v69 = vshrl.u32 %v68, 7
    %v70 = vsub.s32 1, %v69
    %v71 = vrot.slane %v62, %v70
    %72 = vrot.lane.b32.xlu0 %v67, 111
    %v73 = vpop.permute.xlu0 %72
    %74 = vrot.lane.b32.xlu0 %v71, 111
    %v75 = vpop.permute.xlu0 %74
    %vm76 = vcmask 908288
    %v77 = vsel %vm76, %v73, %v75
    %v81 = vmul.f32 %v59, %v73
    %v82 = vmul.f32 %v60, %v77
    %v83 = vmul.f32 %v61, %v75
    %87 = vrot.lane.b32.xlu0 %v81, 17
    %v88 = vpop.permute.xlu0 %87
    %89 = vrot.lane.b32.xlu0 %v82, 17
    %v90 = vpop.permute.xlu0 %89
    %91 = vrot.lane.b32.xlu0 %v83, 17
    %v92 = vpop.permute.xlu0 %91
    %v93 = vsel %vm40, %v88, %v90
    %v94 = vsel %vm40, %v90, %v92
    %v97 = vadd.f32 %v52, %v93
    %v98 = vadd.f32 %v56, %v94
    %s99 = scalar_lea.vmem [#allocation3], 1
    %v100 = vld [vmem:[%s99] ss:$8 sm:$0x3]
    %v102 = vlaneseq
    %v103 = vshrl.u32 %v102, 7
    %v104 = vsub.s32 0, %v103
    %v105 = vrot.slane %v100, %v104
    %v106 = vlaneseq
    %v107 = vshrl.u32 %v106, 7
    %v108 = vsub.s32 1, %v107
    %v109 = vrot.slane %v100, %v108
    %110 = vrot.lane.b32.xlu0 %v105, 112
    %v111 = vpop.permute.xlu0 %110
    %112 = vrot.lane.b32.xlu0 %v109, 112
    %v113 = vpop.permute.xlu0 %112
    %vm114 = vcmask 916480
    %v115 = vsel %vm114, %v111, %v113
    %v119 = vmul.f32 %v59, %v111
    %v120 = vmul.f32 %v60, %v115
    %v121 = vmul.f32 %v61, %v113
    %125 = vrot.lane.b32.xlu0 %v119, 16
    %v126 = vpop.permute.xlu0 %125
    %127 = vrot.lane.b32.xlu0 %v120, 16
    %v128 = vpop.permute.xlu0 %127
    %129 = vrot.lane.b32.xlu0 %v121, 16
    %v130 = vpop.permute.xlu0 %129
    %vm131 = vcmask 130048
    %v132 = vsel %vm131, %v126, %v128
    %v133 = vsel %vm131, %v128, %v130
    %v136 = vadd.f32 %v97, %v132
    %v137 = vadd.f32 %v98, %v133
    %s138 = scalar_lea.vmem [#allocation3], 2
    %v139 = vld [vmem:[%s138] ss:$8 sm:$0x3]
    %v141 = vlaneseq
    %v142 = vshrl.u32 %v141, 7
    %v143 = vsub.s32 0, %v142
    %v144 = vrot.slane %v139, %v143
    %v145 = vlaneseq
    %v146 = vshrl.u32 %v145, 7
    %v147 = vsub.s32 1, %v146
    %v148 = vrot.slane %v139, %v147
    %149 = vrot.lane.b32.xlu0 %v144, 113
    %v150 = vpop.permute.xlu0 %149
    %151 = vrot.lane.b32.xlu0 %v148, 113
    %v152 = vpop.permute.xlu0 %151
    %vm153 = vcmask 924672
    %v154 = vsel %vm153, %v150, %v152
    %v158 = vmul.f32 %v59, %v150
    %v159 = vmul.f32 %v60, %v154
    %v160 = vmul.f32 %v61, %v152
    %164 = vrot.lane.b32.xlu0 %v158, 15
    %v165 = vpop.permute.xlu0 %164
    %166 = vrot.lane.b32.xlu0 %v159, 15
    %v167 = vpop.permute.xlu0 %166
    %168 = vrot.lane.b32.xlu0 %v160, 15
    %v169 = vpop.permute.xlu0 %168
    %vm170 = vcmask 121856
    %v171 = vsel %vm170, %v165, %v167
    %v172 = vsel %vm170, %v167, %v169
    %v175 = vadd.f32 %v136, %v171
    %v176 = vadd.f32 %v137, %v172
    %s177 = scalar_lea.vmem [#allocation3], 3
    %v178 = vld [vmem:[%s177] ss:$8 sm:$0x3]
    %v180 = vlaneseq
    %v181 = vshrl.u32 %v180, 7
    %v182 = vsub.s32 0, %v181
    %v183 = vrot.slane %v178, %v182
    %v184 = vlaneseq
    %v185 = vshrl.u32 %v184, 7
    %v186 = vsub.s32 1, %v185
    %v187 = vrot.slane %v178, %v186
    %188 = vrot.lane.b32.xlu0 %v183, 127
    %v189 = vpop.permute.xlu0 %188
    %190 = vrot.lane.b32.xlu0 %v187, 127
    %v191 = vpop.permute.xlu0 %190
    %vm192 = vcmask 1039360
    %v193 = vsel %vm192, %v189, %v191
    %v197 = vmul.f32 %v59, %v189
    %v198 = vmul.f32 %v60, %v193
    %v199 = vmul.f32 %v61, %v191
    %203 = vrot.lane.b32.xlu0 %v197, 1
    %v204 = vpop.permute.xlu0 %203
    %205 = vrot.lane.b32.xlu0 %v198, 1
    %v206 = vpop.permute.xlu0 %205
    %207 = vrot.lane.b32.xlu0 %v199, 1
    %v208 = vpop.permute.xlu0 %207
    %vm209 = vcmask 7168
    %v210 = vsel %vm209, %v204, %v206
    %v211 = vsel %vm209, %v206, %v208
    %v214 = vadd.f32 %v175, %v210
    %v215 = vadd.f32 %v176, %v211
    %s216 = scalar_lea.vmem [#allocation3], 4
    %v217 = vld [vmem:[%s216] ss:$8 sm:$0x3]
    %v219 = vlaneseq
    %v220 = vshrl.u32 %v219, 7
    %v221 = vsub.s32 0, %v220
    %v222 = vrot.slane %v217, %v221
    %v223 = vlaneseq
    %v224 = vshrl.u32 %v223, 7
    %v225 = vsub.s32 1, %v224
    %v226 = vrot.slane %v217, %v225
    %v229 = vmul.f32 %v60, %v222
    %v230 = vmul.f32 %v61, %v226
    %v231 = vadd.f32 %v214, %v229
    %v232 = vadd.f32 %v215, %v230
    %v233 = vld [vmem:[#allocation2 + $0x18] sm:$0xff]
    %s234 = scalar_lea.vmem [#allocation3], 5
    %v235 = vld [vmem:[%s234] ss:$8 sm:$0x3]
    %v237 = vlaneseq
    %v238 = vshrl.u32 %v237, 7
    %v239 = vsub.s32 0, %v238
    %v240 = vrot.slane %v235, %v239
    %v241 = vlaneseq
    %v242 = vshrl.u32 %v241, 7
    %v243 = vsub.s32 1, %v242
    %v244 = vrot.slane %v235, %v243
    %245 = vrot.lane.b32.xlu0 %v240, 1
    %v246 = vpop.permute.xlu0 %245
    %247 = vrot.lane.b32.xlu0 %v244, 1
    %v248 = vpop.permute.xlu0 %247
    %v249 = vsel %vm209, %v246, %v248
    %v253 = vmul.f32 %v60, %v246
    %v254 = vmul.f32 %v61, %v249
    %v255 = vmul.f32 %v233, %v248
    %259 = vrot.lane.b32.xlu0 %v253, 127
    %v260 = vpop.permute.xlu0 %259
    %261 = vrot.lane.b32.xlu0 %v254, 127
    %v262 = vpop.permute.xlu0 %261
    %263 = vrot.lane.b32.xlu0 %v255, 127
    %v264 = vpop.permute.xlu0 %263
    %v265 = vsel %vm192, %v260, %v262
    %v266 = vsel %vm192, %v262, %v264
    %v269 = vadd.f32 %v231, %v265
    %v270 = vadd.f32 %v232, %v266
    %s271 = scalar_lea.vmem [#allocation3], 6
    %v272 = vld [vmem:[%s271] ss:$8 sm:$0x3]
    %v274 = vlaneseq
    %v275 = vshrl.u32 %v274, 7
    %v276 = vsub.s32 0, %v275
    %v277 = vrot.slane %v272, %v276
    %v278 = vlaneseq
    %v279 = vshrl.u32 %v278, 7
    %v280 = vsub.s32 1, %v279
    %v281 = vrot.slane %v272, %v280
    %282 = vrot.lane.b32.xlu0 %v277, 15
    %v283 = vpop.permute.xlu0 %282
    %284 = vrot.lane.b32.xlu0 %v281, 15
    %v285 = vpop.permute.xlu0 %284
    %v286 = vsel %vm170, %v283, %v285
    %v290 = vmul.f32 %v60, %v283
    %v291 = vmul.f32 %v61, %v286
    %v292 = vmul.f32 %v233, %v285
    %296 = vrot.lane.b32.xlu0 %v290, 113
    %v297 = vpop.permute.xlu0 %296
    %298 = vrot.lane.b32.xlu0 %v291, 113
    %v299 = vpop.permute.xlu0 %298
    %300 = vrot.lane.b32.xlu0 %v292, 113
    %v301 = vpop.permute.xlu0 %300
    %v302 = vsel %vm153, %v297, %v299
    %v303 = vsel %vm153, %v299, %v301
    %v306 = vadd.f32 %v269, %v302
    %v307 = vadd.f32 %v270, %v303
    %s308 = scalar_lea.vmem [#allocation3], 7
    %v309 = vld [vmem:[%s308] ss:$8 sm:$0x3]
    %v311 = vlaneseq
    %v312 = vshrl.u32 %v311, 7
    %v313 = vsub.s32 0, %v312
    %v314 = vrot.slane %v309, %v313
    %v315 = vlaneseq
    %v316 = vshrl.u32 %v315, 7
    %v317 = vsub.s32 1, %v316
    %v318 = vrot.slane %v309, %v317
    %319 = vrot.lane.b32.xlu0 %v314, 16
    %v320 = vpop.permute.xlu0 %319
    %321 = vrot.lane.b32.xlu0 %v318, 16
    %v322 = vpop.permute.xlu0 %321
    %v323 = vsel %vm131, %v320, %v322
    %v327 = vmul.f32 %v60, %v320
    %v328 = vmul.f32 %v61, %v323
    %v329 = vmul.f32 %v233, %v322
    %333 = vrot.lane.b32.xlu0 %v327, 112
    %v334 = vpop.permute.xlu0 %333
    %335 = vrot.lane.b32.xlu0 %v328, 112
    %v336 = vpop.permute.xlu0 %335
    %337 = vrot.lane.b32.xlu0 %v329, 112
    %v338 = vpop.permute.xlu0 %337
    %v339 = vsel %vm114, %v334, %v336
    %v340 = vsel %vm114, %v336, %v338
    %v343 = vadd.f32 %v306, %v339
    %v344 = vadd.f32 %v307, %v340
    %s345 = scalar_lea.vmem [#allocation3], 16
    %v346 = vld [vmem:[%s345] ss:$8 sm:$0x3]
    %v348 = vlaneseq
    %v349 = vshrl.u32 %v348, 7
    %v350 = vsub.s32 0, %v349
    %v351 = vrot.slane %v346, %v350
    %v352 = vlaneseq
    %v353 = vshrl.u32 %v352, 7
    %v354 = vsub.s32 1, %v353
    %v355 = vrot.slane %v346, %v354
    %356 = vrot.lane.b32.xlu0 %v351, 17
    %v357 = vpop.permute.xlu0 %356
    %358 = vrot.lane.b32.xlu0 %v355, 17
    %v359 = vpop.permute.xlu0 %358
    %v360 = vsel %vm40, %v357, %v359
    %v364 = vmul.f32 %v60, %v357
    %v365 = vmul.f32 %v61, %v360
    %v366 = vmul.f32 %v233, %v359
    %370 = vrot.lane.b32.xlu0 %v364, 111
    %v371 = vpop.permute.xlu0 %370
    %372 = vrot.lane.b32.xlu0 %v365, 111
    %v373 = vpop.permute.xlu0 %372
    %374 = vrot.lane.b32.xlu0 %v366, 111
    %v375 = vpop.permute.xlu0 %374
    %v376 = vsel %vm76, %v371, %v373
    %v377 = vsel %vm76, %v373, %v375
    %v380 = vadd.f32 %v343, %v376
    %v381 = vadd.f32 %v344, %v377
    %382 = vst [vmem:[#allocation8] sm:$0xff] %v380
    %383 = vst [vmem:[#allocation8 + $0x8] sm:$0xff] %v381
    // Predicated region
    $region18: #{tpu_custom_call.1} parent=1 // pred_check
      _
    $region19: #{tpu_custom_call.1} parent=1 // pred_check_branch
      %385 = sbr.rel (0) target = $region21
    $region20: #{tpu_custom_call.1} parent=1 // pred_region
      %s387 = ssub.s32 256, 256
      %388 = vsyncadd [#allocation5], %s387
      %s390 = sshll.u32 [#allocation8], 4
      %s391 = int_to_ptr.vmem [resolvable:$true] %s390
      %393 = dma.vmem_to_hbm [thread:$0]  %s391, 256, %s2, [#allocation5]
    $region21: #{tpu_custom_call.1} parent=1 // pred_fallthru
      _
    // Predicated region
    $region22: #{tpu_custom_call.1} parent=1 // pred_check
      _
    $region23: #{tpu_custom_call.1} parent=1 // pred_check_branch
      %395 = sbr.rel (0) target = $region25
    $region24: #{tpu_custom_call.1} parent=1 // pred_region
      %396 = dma.done [#allocation5], 256
    $region25: #{tpu_custom_call.1} parent=1 // pred_fallthru
      _
    %397 = vsyncpa [#allocation4], 1
    %398 = vsyncpa [#allocation7], 1
    %399 = vsyncpa [#allocation5], 1

</llo_original>
